<compile_context>
chip_gen: v7x
topology: tpu7x:2x2x1
jax: 0.10.0
libtpu: 0.0.40
codegen_flags: <defaults>
</compile_context>

<pallas_src>
import math

import jax
import jax.numpy as jnp
from jax.experimental import pallas as pl
from jax.experimental.pallas import tpu as pltpu


def create_position_embedding(max_len: int, emb_dim: int) -> jnp.ndarray:
    """Sin/cos positional encoding, identical to the PyTorch static method."""
    position = jnp.arange(0, max_len, dtype=jnp.float32)[:, None]            # (L, 1)
    div_term = jnp.exp(
        jnp.arange(0, emb_dim, 2, dtype=jnp.float32) * (-math.log(10000.0) / emb_dim)
    )                                                                         # (D/2,)
    pe = jnp.zeros((max_len, emb_dim), dtype=jnp.float32)
    pe = pe.at[:, 0::2].set(jnp.sin(position * div_term))
    pe = pe.at[:, 1::2].set(jnp.cos(position * div_term))
    return pe                                                                 # (L, D)


def _pos_emb_kernel(pos_ref, proj_ref, x_ref, o_ref):
    # pos_ref : (1, tS, Df)  positional slab for this s-tile (shared over batch)
    # proj_ref: (B, 1,  Df)  all per-batch projection rows (resident, never re-DMA'd)
    # x_ref   : (1, tS, Df)  input tile
    # o_ref   : (1, tS, Df)  output tile
    b = pl.program_id(1)
    proj_row = proj_ref[b]                                    # (1, Df), dynamic row pick
    o_ref[...] = (x_ref[...] + pos_ref[...] + proj_row).astype(o_ref.dtype)


def _choose_row_tile(num_rows: int, row_elems: int, itemsize: int,
                     target_bytes: int = 4 * 1024 * 1024) -> int:
    """Largest row count whose tile is <= target_bytes, multiple of the native
    sublane tile (8 f32 / 16 bf16 / 32 int8), or the full extent."""
    sub = max(8, 32 // max(1, itemsize))
    rows = target_bytes // max(1, row_elems * itemsize)
    if rows >= num_rows:
        return num_rows
    rows = max(sub, (rows // sub) * sub)
    return min(rows, num_rows)


def _lane_fold(S: int, D: int):
    """Fold factor k so k*D is a multiple of 128, and padded sequence length.

    Returns (k, S_pad).  Falls back to (1, S) when the required padding would
    inflate traffic noticeably (degenerate D, tiny S)."""
    k = 128 // math.gcd(D, 128)                 # == lcm(D, 128) // D
    if k == 1:
        return 1, S
    S_pad = -(-S // k) * k
    if (S_pad - S) > max(0, S // 8):            # > ~12.5% padding -> not worth it
        return 1, S
    return k, S_pad


def position_embedding_forward(x, param_J, pos_emb, w_t, bias, *,
                               donate_x: bool = False,
                               force_pallas: bool = False):
    """x: (B, S, D), param_J: (B, 2), pos_emb: (L, D), w_t: (2, D), bias: (D,)."""
    B, S, D = x.shape
    dtype = x.dtype
    itemsize = jnp.dtype(dtype).itemsize

    # Hoisted projection: tiny O(B*D) XLA op (negligible HBM traffic).
    proj = (param_J.astype(jnp.float32) @ w_t.astype(jnp.float32)
            + bias.astype(jnp.float32)).astype(dtype)                        # (B, D)
    pos = pos_emb[:S, :].astype(dtype)                                       # (S, D)

    # Tiny-shape fallback: below ~1 MiB the fixed pallas_call + per-step
    # overhead dwarfs the useful traffic; XLA's fused add is strictly faster.
    if not force_pallas and B * S * D * itemsize < (1 << 20):
        return x + pos[None] + proj[:, None, :]

    # Generalized lane-density fold (pad S up to a multiple of k, slice after).
    k, S_pad = _lane_fold(S, D)
    if S_pad != S:
        pad = S_pad - S
        x = jnp.pad(x, ((0, 0), (0, pad), (0, 0)))
        pos = jnp.pad(pos, ((0, pad), (0, 0)))
    Sf, Df = S_pad // k, D * k

    xf = x.reshape(B, Sf, Df)                                                 # bitcast reshape
    posf = pos.reshape(1, Sf, Df)
    projf = jnp.tile(proj, (1, k)).reshape(B, 1, Df)                          # (B, 1, Df)

    tS = _choose_row_tile(Sf, Df, itemsize)
    # Make sure v7x's two TensorCores both get grid work when possible.
    sub = max(8, 32 // itemsize)
    if B * pl.cdiv(Sf, tS) < 2 and Sf >= 2 * sub:
        tS = max(sub, ((-(-Sf // 2)) // sub) * sub)
    grid = (pl.cdiv(Sf, tS), B)   # batch innermost -> pos re-DMA'd only per s-tile

    kwargs = {}
    if donate_x:
        kwargs["input_output_aliases"] = {2: 0}   # alias x (3rd input) -> out

    out = pl.pallas_call(
        _pos_emb_kernel,
        out_shape=jax.ShapeDtypeStruct((B, Sf, Df), dtype),
        grid_spec=pltpu.PrefetchScalarGridSpec(
            num_scalar_prefetch=0,
            grid=grid,
            in_specs=[
                pl.BlockSpec((1, tS, Df), lambda s, b: (0, s, 0)),   # pos slab (shared)
                pl.BlockSpec((B, 1, Df), lambda s, b: (0, 0, 0)),    # proj (resident)
                pl.BlockSpec((1, tS, Df), lambda s, b: (b, s, 0)),   # x tile
            ],
            out_specs=pl.BlockSpec((1, tS, Df), lambda s, b: (b, s, 0)),
        ),
        compiler_params=pltpu.CompilerParams(
            dimension_semantics=("parallel", "parallel"),
            vmem_limit_bytes=48 << 20,
        ),
        **kwargs,
    )(posf, projf, xf)

    out = out.reshape(B, S_pad, D)
    return out[:, :S, :] if S_pad != S else out


def _reference(x, param_J, pos_emb, w_t, bias):
    S = x.shape[1]
    return x + pos_emb[None, :S, :] + (param_J @ w_t + bias)[:, None, :]


if __name__ == "__main__":
    key = jax.random.PRNGKey(0)

    def make_case(key, B, S, D, max_len):
        kx, kj, kw, kb = jax.random.split(key, 4)
        x = jax.random.normal(kx, (B, S, D), dtype=jnp.float32)
        param_J = jax.random.normal(kj, (B, 2), dtype=jnp.float32)
        bound = 1.0 / math.sqrt(2.0)
        w_t = jax.random.uniform(kw, (2, D), jnp.float32, minval=-bound, maxval=bound)
        bias = jax.random.uniform(kb, (D,), jnp.float32, minval=-bound, maxval=bound)
        pos_emb = create_position_embedding(max_len, D)
        return x, param_J, pos_emb, w_t, bias

    # Case 1: small shapes consistent with the module (batch=2, seq=8, D=32),
    # forced through the Pallas path (fold k=4 -> Df=128, no padding).
    k1, k2, k3 = jax.random.split(key, 3)
    x, pj, pe, wt, b = make_case(k1, B=2, S=8, D=32, max_len=16)
    out = jax.block_until_ready(position_embedding_forward(x, pj, pe, wt, b,
                                                           force_pallas=True))
    assert out.shape == x.shape
    assert jnp.allclose(out, _reference(x, pj, pe, wt, b), atol=1e-5, rtol=1e-5)

    # Case 2: odd D (48) and S (100) -> generalized fold k=8 with S padded to 104.
    x, pj, pe, wt, b = make_case(k2, B=2, S=100, D=48, max_len=128)
    out = jax.block_until_ready(position_embedding_forward(x, pj, pe, wt, b,
                                                           force_pallas=True))
    assert out.shape == x.shape
    assert jnp.allclose(out, _reference(x, pj, pe, wt, b), atol=1e-5, rtol=1e-5)

    # Case 3: B=1 -> s-axis split so a 2-TC chip gets >= 2 grid steps.
    x, pj, pe, wt, b = make_case(k3, B=1, S=512, D=128, max_len=512)
    out = jax.block_until_ready(position_embedding_forward(x, pj, pe, wt, b,
                                                           force_pallas=True))
    assert out.shape == x.shape
    assert jnp.allclose(out, _reference(x, pj, pe, wt, b), atol=1e-5, rtol=1e-5)

    # Case 4: tiny-shape XLA fallback path (default flags).
    x, pj, pe, wt, b = make_case(k1, B=2, S=8, D=32, max_len=16)
    out = jax.block_until_ready(position_embedding_forward(x, pj, pe, wt, b))
    assert jnp.allclose(out, _reference(x, pj, pe, wt, b), atol=1e-5, rtol=1e-5)

    print("KERNEL_OK")
</pallas_src>

<mosaic_0001>
module attributes {stable_mosaic.version = 11 : i64} {
  func.func @_pos_emb_kernel(%arg0: i32, %arg1: i32, %arg2: memref<1x2x128xf32, #tpu.memory_space<vmem>>, %arg3: memref<2x1x128xf32, #tpu.memory_space<vmem>>, %arg4: memref<1x2x128xf32, #tpu.memory_space<vmem>>, %arg5: memref<1x2x128xf32, #tpu.memory_space<vmem>>) attributes {dimension_semantics = [#tpu.dimension_semantics<parallel>, #tpu.dimension_semantics<parallel>], iteration_bounds = array<i64: 1, 2>, scalar_prefetch = 0 : i64, scratch_operands = 0 : i64, tpu.core_type = #tpu.core_type<tc>, window_params = [{transform_indices = @transform_0, window_bounds = array<i64: 1, 2, 128>}, {pipeline_mode = #tpu.pipeline_mode<synchronous>, transform_indices = @transform_1, window_bounds = array<i64: 2, 1, 128>}, {transform_indices = @transform_2, window_bounds = array<i64: 1, 2, 128>}, {transform_indices = @transform_3, window_bounds = array<i64: 1, 2, 128>}]} {
    %0 = arith.index_cast %arg1 : i32 to index
    %c0 = arith.constant 0 : index
    %c0_0 = arith.constant 0 : index
    %1 = vector.load %arg3[%0, %c0, %c0_0] : memref<2x1x128xf32, #tpu.memory_space<vmem>>, vector<1x1x128xf32>
    %2 = vector.shape_cast %1 : vector<1x1x128xf32> to vector<1x128xf32>
    %c0_1 = arith.constant 0 : index
    %c0_2 = arith.constant 0 : index
    %c0_3 = arith.constant 0 : index
    %3 = vector.load %arg4[%c0_1, %c0_2, %c0_3] : memref<1x2x128xf32, #tpu.memory_space<vmem>>, vector<1x2x128xf32>
    %c0_4 = arith.constant 0 : index
    %c0_5 = arith.constant 0 : index
    %c0_6 = arith.constant 0 : index
    %4 = vector.load %arg2[%c0_4, %c0_5, %c0_6] : memref<1x2x128xf32, #tpu.memory_space<vmem>>, vector<1x2x128xf32>
    %5 = arith.addf %3, %4 : vector<1x2x128xf32>
    %6 = vector.shape_cast %2 : vector<1x128xf32> to vector<1x1x128xf32>
    %7 = vector.broadcast %6 : vector<1x1x128xf32> to vector<1x2x128xf32>
    %8 = arith.addf %5, %7 : vector<1x2x128xf32>
    %c0_7 = arith.constant 0 : index
    %c0_8 = arith.constant 0 : index
    %c0_9 = arith.constant 0 : index
    %9 = vector.load %arg5[%c0_7, %c0_8, %c0_9] : memref<1x2x128xf32, #tpu.memory_space<vmem>>, vector<1x2x128xf32>
    tpu.vector_store %arg5[%c0_7, %c0_8, %c0_9], %8 {strides = array<i32>} : memref<1x2x128xf32, #tpu.memory_space<vmem>>, vector<1x2x128xf32>,
    return
  }
  func.func @transform_0(%arg0: i32, %arg1: i32) -> (i32, i32, i32) {
    %c0_i32 = arith.constant 0 : i32
    %c0_i32_0 = arith.constant 0 : i32
    %c0_i32_1 = arith.constant 0 : i32
    return %c0_i32, %arg0, %c0_i32_0 : i32, i32, i32
  }
  func.func @transform_1(%arg0: i32, %arg1: i32) -> (i32, i32, i32) {
    %c0_i32 = arith.constant 0 : i32
    %c0_i32_0 = arith.constant 0 : i32
    %c0_i32_1 = arith.constant 0 : i32
    %c0_i32_2 = arith.constant 0 : i32
    return %c0_i32, %c0_i32_0, %c0_i32_1 : i32, i32, i32
  }
  func.func @transform_2(%arg0: i32, %arg1: i32) -> (i32, i32, i32) {
    %c0_i32 = arith.constant 0 : i32
    %c0_i32_0 = arith.constant 0 : i32
    return %arg1, %arg0, %c0_i32 : i32, i32, i32
  }
  func.func @transform_3(%arg0: i32, %arg1: i32) -> (i32, i32, i32) {
    %c0_i32 = arith.constant 0 : i32
    %c0_i32_0 = arith.constant 0 : i32
    return %arg1, %arg0, %c0_i32 : i32, i32, i32
  }
}

</mosaic_0001>

<llo_original>
// kernel: tpu_custom_call.1
$region0: #{tpu_custom_call.1}
  #allocation0 [shape = 'u32[]', space=smem, size = 0x4, offset = 0x4, fixed_abs, tag = 'smem constant byte address 0x4 - core index']
  #allocation1 [shape = 'u32[144,128]{1,0:T(1,128)}', space=vmem, size = 0x12000, scoped, tag = 'internal scratch']
  %s0 = inlined_call_operand.hbm [shape: f32[1,2,128], index: 0, kind: input, shape index: {}]
  %s1 = inlined_call_operand.vmem [shape: f32[2,1,128], index: 1, kind: input, shape index: {}]
  %s2 = inlined_call_operand.vmem [shape: f32[2,2,128], index: 2, kind: input, shape index: {}]
  %s3 = inlined_call_operand.hbm [shape: f32[2,2,128], index: 3, kind: output, shape index: {}]
  %s4 = sld [smem:[#allocation0]]
  $region49: #{tpu_custom_call.1} parent=0
    _
  %s6 = ssub.s32 1, %s4
  %s7 = scalar_select 0, %s6, %s4
  $region1: #{tpu_custom_call.1} parent=0
    #allocation2 [shape = 'u8[1024]{0}', space=vmem, size = 0x400, scoped, tag = 'input window, operand 0, single buffered']
    #allocation3 [shape = 's32[2]{0}', space=sflag, size = 0x8, scoped, tag = 'scoped memory for tpu_custom_call.1']
    #allocation4 [shape = 's32[2]{0}', space=sflag, size = 0x8, scoped, tag = 'scoped memory for tpu_custom_call.1']
    #allocation5 [shape = 'u8[2048]{0}', space=vmem, size = 0x800, scoped, tag = 'output window, operand 0']
    %8 = vsyncpa [#allocation3], 0
    %9 = vsyncpa [#allocation4], 0
    %s10 = scalar_lea.sflag [#allocation4], 1
    %11 = vsyncpa %s10, 0
    loop: start=0, step=1, limit=4
    $region2: #{tpu_custom_call.1} parent=1 // loop_pre_header
      _
    $region3: #{tpu_custom_call.1} parent=1 // loop_header
      %s13 = sphi 0, %s17
      %p14 = scmp.ge.s32.totalorder %s13, 4
      %s20 = sphi 0, %s32
      %s21 = sphi 0, %s28
      %s22 = sphi 0, %s20
      %s23 = sphi 0, %s21
      %s24 = sphi 0, %s22
      %s25 = sphi 0, %s23
      %s35 = sphi 0, %s37
      %s38 = sphi 0, %s35
      %s39 = sphi 0, %s38
      %s55 = sphi 0, %s39
      %s59 = sphi 0, %s59
      %s61 = sphi 0, %s59
      %s62 = sphi 0, %s61
      %s76 = sphi 0, %s62
      %s84 = sphi 0, %s86
      %s87 = sphi 0, %s84
      %s88 = sphi 0, %s87
      %s104 = sphi 0, %s88
      %s112 = sphi 0, %s114
      %s115 = sphi 0, %s112
      %s116 = sphi 0, %s115
      %s132 = sphi 0, %s116
    $region4: #{tpu_custom_call.1} parent=1 // loop_header_branch
      %16 = sbr.rel (%p14) target = $region8
    $region5: #{tpu_custom_call.1} parent=1 // loop_body
      %s18 = ssub.s32 %s13, 1
      %s19 = ssub.s32 %s13, 2
      %s26 = sadd.s32 1, %s21
      %p27 = scmp.ge.s32.totalorder %s26, 2
      %s28 = scalar_select %p27, 0, %s26
      %s29 = sadd.s32 1, %s20
      %s30 = scalar_select %p27, %s29, %s20
      %p31 = scmp.ge.s32.totalorder %s30, 1
      %s32 = scalar_select %p31, 0, %s30
      %s33 = ssub.s32 %s20, %s32
      %p34 = scmp.eq.s32.totalorder %s33, 0
      %s36 = sadd.s32 %s35, 1
      %s37 = scalar_select %p34, %s35, %s36
      %p40 = pneg %p34
      %p41 = scmp.eq.s32.totalorder %s13, 1
      %p42 = por %p40, %p41
      %p43 = scmp.ne.s32.totalorder %s35, %s38
      %p44 = scmp.eq.s32.totalorder %s13, 0
      %p45 = por %p43, %p44
      %p46 = scmp.ne.s32.totalorder %s35, %s38
      %p47 = scmp.eq.s32.totalorder %s18, 1
      %p48 = por %p46, %p47
      %p49 = scmp.ne.s32.totalorder %s38, %s39
      %p50 = scmp.eq.s32.totalorder %s18, 0
      %p51 = por %p49, %p50
      %p52 = scmp.ne.s32.totalorder %s38, %s39
      %p53 = scmp.eq.s32.totalorder %s19, 1
      %p54 = por %p52, %p53
      %p56 = scmp.ne.s32.totalorder %s39, %s55
      %p57 = scmp.eq.s32.totalorder %s19, 0
      %p58 = por %p56, %p57
      %s60 = sadd.s32 %s59, 1
      %p63 = scmp.eq.s32.totalorder %s13, 1
      %p64 = scmp.ne.s32.totalorder %s59, %s61
      %p65 = scmp.eq.s32.totalorder %s13, 0
      %p66 = por %p64, %p65
      %p67 = scmp.ne.s32.totalorder %s59, %s61
      %p68 = scmp.eq.s32.totalorder %s18, 1
      %p69 = por %p67, %p68
      %p70 = scmp.ne.s32.totalorder %s61, %s62
      %p71 = scmp.eq.s32.totalorder %s18, 0
      %p72 = por %p70, %p71
      %p73 = scmp.ne.s32.totalorder %s61, %s62
      %p74 = scmp.eq.s32.totalorder %s19, 1
      %p75 = por %p73, %p74
      %p77 = scmp.ne.s32.totalorder %s62, %s76
      %p78 = scmp.eq.s32.totalorder %s19, 0
      %p79 = por %p77, %p78
      %s80 = ssub.s32 %s21, %s28
      %s81 = ssub.s32 %s20, %s32
      %s82 = sor.u32 %s80, %s81
      %p83 = scmp.eq.s32.totalorder %s82, 0
      %s85 = sadd.s32 %s84, 1
      %s86 = scalar_select %p83, %s84, %s85
      %p89 = pneg %p83
      %p90 = scmp.eq.s32.totalorder %s13, 1
      %p91 = por %p89, %p90
      %p92 = scmp.ne.s32.totalorder %s84, %s87
      %p93 = scmp.eq.s32.totalorder %s13, 0
      %p94 = por %p92, %p93
      %p95 = scmp.ne.s32.totalorder %s84, %s87
      %p96 = scmp.eq.s32.totalorder %s18, 1
      %p97 = por %p95, %p96
      %p98 = scmp.ne.s32.totalorder %s87, %s88
      %p99 = scmp.eq.s32.totalorder %s18, 0
      %p100 = por %p98, %p99
      %p101 = scmp.ne.s32.totalorder %s87, %s88
      %p102 = scmp.eq.s32.totalorder %s19, 1
      %p103 = por %p101, %p102
      %p105 = scmp.ne.s32.totalorder %s88, %s104
      %p106 = scmp.eq.s32.totalorder %s19, 0
      %p107 = por %p105, %p106
      %s108 = ssub.s32 %s21, %s28
      %s109 = ssub.s32 %s20, %s32
      %s110 = sor.u32 %s108, %s109
      %p111 = scmp.eq.s32.totalorder %s110, 0
      %s113 = sadd.s32 %s112, 1
      %s114 = scalar_select %p111, %s112, %s113
      %p117 = pneg %p111
      %p118 = scmp.eq.s32.totalorder %s13, 1
      %p119 = por %p117, %p118
      %p120 = scmp.ne.s32.totalorder %s112, %s115
      %p121 = scmp.eq.s32.totalorder %s13, 0
      %p122 = por %p120, %p121
      %p123 = scmp.ne.s32.totalorder %s112, %s115
      %p124 = scmp.eq.s32.totalorder %s18, 1
      %p125 = por %p123, %p124
      %p126 = scmp.ne.s32.totalorder %s115, %s116
      %p127 = scmp.eq.s32.totalorder %s18, 0
      %p128 = por %p126, %p127
      %p129 = scmp.ne.s32.totalorder %s115, %s116
      %p130 = scmp.eq.s32.totalorder %s19, 1
      %p131 = por %p129, %p130
      %p133 = scmp.ne.s32.totalorder %s116, %s132
      %p134 = scmp.eq.s32.totalorder %s19, 0
      %p135 = por %p133, %p134
      %p136 = scmp.le.s32.totalorder 1, %s13
      %p137 = scmp.lt.s32.totalorder %s13, 3
      %p138 = pnand %p136, %p137
      %p139 = pneg %p138
      // Predicated region
      $region9: #{tpu_custom_call.1} parent=5 // pred_check
        _
      $region10: #{tpu_custom_call.1} parent=5 // pred_check_branch
        %141 = sbr.rel (%p138) target = $region12
      $region11: #{tpu_custom_call.1} parent=5 // pred_region
        %s142 = ssub.s32 %s13, 1
        // Predicated region
        $region13: #{tpu_custom_call.1} parent=11 // pred_check
          %p143 = pneg %p51
        $region14: #{tpu_custom_call.1} parent=11 // pred_check_branch
          %145 = sbr.rel (%p143) target = $region16
        $region15: #{tpu_custom_call.1} parent=11 // pred_region
          %s147 = ssub.s32 32, 32
          %148 = vsyncadd [#allocation3], %s147
          %s149 = smul.addr %s22, 32
          %s150 = scalar_lea.hbm %s0, %s149
          %s152 = sshll.u32 [#allocation2], 4
          %s153 = int_to_ptr.vmem [resolvable:$true] %s152
          %155 = dma.hbm_to_vmem [thread:$0]  %s150, 32, %s153, [#allocation3]
        $region16: #{tpu_custom_call.1} parent=11 // pred_fallthru
          _
        // Predicated region
        $region17: #{tpu_custom_call.1} parent=11 // pred_check
          %p156 = pneg %p72
        $region18: #{tpu_custom_call.1} parent=11 // pred_check_branch
          %158 = sbr.rel (%p156) target = $region20
        $region19: #{tpu_custom_call.1} parent=11 // pred_region
          _
        $region20: #{tpu_custom_call.1} parent=11 // pred_fallthru
          _
      $region12: #{tpu_custom_call.1} parent=5 // pred_fallthru
        _
      %p159 = scmp.lt.s32.totalorder %s13, 2
      // Predicated region
      $region21: #{tpu_custom_call.1} parent=5 // pred_check
        %p160 = pneg %p159
      $region22: #{tpu_custom_call.1} parent=5 // pred_check_branch
        %162 = sbr.rel (%p160) target = $region24
      $region23: #{tpu_custom_call.1} parent=5 // pred_region
        // Predicated region
        $region25: #{tpu_custom_call.1} parent=23 // pred_check
          %p163 = pneg %p94
        $region26: #{tpu_custom_call.1} parent=23 // pred_check_branch
          %165 = sbr.rel (%p163) target = $region28
        $region27: #{tpu_custom_call.1} parent=23 // pred_region
          %p166 = scmp.lt.s32.totalorder %s21, 1
          %s167 = scalar_select %p166, %s21, 1
          %p168 = scmp.lt.s32.totalorder %s20, 0
          %s169 = scalar_select %p168, %s20, 0
          %s170 = sadd.s32 %s169, %s167
          %s171 = smul.addr %s170, 2
          %s172 = scalar_lea.vmem %s2, %s171
        $region28: #{tpu_custom_call.1} parent=23 // pred_fallthru
          _
      $region24: #{tpu_custom_call.1} parent=5 // pred_fallthru
        _
      %p173 = scmp.le.s32.totalorder 1, %s13
      %p174 = scmp.lt.s32.totalorder %s13, 3
      %p175 = pnand %p173, %p174
      %p176 = pneg %p175
      // Predicated region
      $region29: #{tpu_custom_call.1} parent=5 // pred_check
        _
      $region30: #{tpu_custom_call.1} parent=5 // pred_check_branch
        %178 = sbr.rel (%p175) target = $region32
      $region31: #{tpu_custom_call.1} parent=5 // pred_region
        %s179 = ssub.s32 %s13, 1
        // Predicated region
        $region33: #{tpu_custom_call.1} parent=31 // pred_check
          %p180 = pneg %p51
        $region34: #{tpu_custom_call.1} parent=31 // pred_check_branch
          %182 = sbr.rel (%p180) target = $region36
        $region35: #{tpu_custom_call.1} parent=31 // pred_region
          %183 = dma.done [#allocation3], 32
        $region36: #{tpu_custom_call.1} parent=31 // pred_fallthru
          _
        %p184 = pneg %p51
        %p185 = pneg %p48
        %p186 = pneg %p72
        %p187 = pneg %p69
        %p188 = scmp.lt.s32.totalorder %s23, 1
        %s189 = scalar_select %p188, %s23, 1
        %p190 = scmp.lt.s32.totalorder %s22, 0
        %s191 = scalar_select %p190, %s22, 0
        %s192 = sadd.s32 %s191, %s189
        %s193 = smul.addr %s192, 2
        %s194 = scalar_lea.vmem %s2, %s193
        %p195 = pneg %p100
        %p196 = pneg %p97
        %p197 = pneg %p128
        %p198 = pneg %p125
        %s199 = sand.u32 %s115, 1
        %s200 = scalar_lea.sflag [#allocation4], %s199
        %s201 = sand.u32 %s115, 1
        %s202 = smul.addr %s201, 2
        %s203 = scalar_lea.vmem [#allocation5], %s202
        %p204 = scmp.lt.s32.totalorder %s23, 1
        %s205 = scalar_select %p204, %s23, 1
        %p206 = scmp.lt.s32.totalorder %s22, 0
        %s207 = scalar_select %p206, %s22, 0
        %s208 = sadd.s32 %s207, %s205
        %s209 = smul.addr %s208, 2
        %s210 = scalar_lea.vmem %s2, %s209
        %s211 = scalar_lea.vmem %s1, %s23
        %v212 = vld [vmem:[%s211] sm:$0x1]
        %v213 = vld [vmem:[%s210] sm:$0x3]
        %v214 = vld [vmem:[#allocation2] sm:$0x3]
        %v215 = vadd.f32 %v213, %v214
        %v217 = vlaneseq
        %v218 = vshrl.u32 %v217, 7
        %v219 = vsub.s32 0, %v218
        %v220 = vrot.slane %v212, %v219
        %v222 = vadd.f32 %v215, %v220
        %223 = vst [vmem:[%s203] sm:$0x3] %v222
        %s224 = sand.u32 %s115, 1
        %s225 = scalar_lea.sflag [#allocation4], %s224
        %s226 = sand.u32 %s115, 1
        %s227 = smul.addr %s226, 2
        %s228 = scalar_lea.vmem [#allocation5], %s227
        // Predicated region
        $region37: #{tpu_custom_call.1} parent=31 // pred_check
          %p229 = pneg %p125
        $region38: #{tpu_custom_call.1} parent=31 // pred_check_branch
          %231 = sbr.rel (%p229) target = $region40
        $region39: #{tpu_custom_call.1} parent=31 // pred_region
          %s233 = ssub.s32 32, 32
          %234 = vsyncadd %s225, %s233
          %s235 = sadd.s32 %s22, %s23
          %s236 = smul.addr %s235, 32
          %s237 = scalar_lea.hbm %s3, %s236
          %s239 = sshll.u32 %s228, 4
          %s240 = int_to_ptr.vmem [resolvable:$true] %s239
          %242 = dma.vmem_to_hbm [thread:$0]  %s240, 32, %s237, %s225
        $region40: #{tpu_custom_call.1} parent=31 // pred_fallthru
          _
      $region32: #{tpu_custom_call.1} parent=5 // pred_fallthru
        _
      %p243 = scmp.le.s32.totalorder 2, %s13
      // Predicated region
      $region41: #{tpu_custom_call.1} parent=5 // pred_check
        %p244 = pneg %p243
      $region42: #{tpu_custom_call.1} parent=5 // pred_check_branch
        %246 = sbr.rel (%p244) target = $region44
      $region43: #{tpu_custom_call.1} parent=5 // pred_region
        %s247 = ssub.s32 %s13, 2
        // Predicated region
        $region45: #{tpu_custom_call.1} parent=43 // pred_check
          %p248 = pneg %p131
        $region46: #{tpu_custom_call.1} parent=43 // pred_check_branch
          %250 = sbr.rel (%p248) target = $region48
        $region47: #{tpu_custom_call.1} parent=43 // pred_region
          %s251 = sand.u32 %s116, 1
          %s252 = scalar_lea.sflag [#allocation4], %s251
          %s253 = sand.u32 %s116, 1
          %s254 = smul.addr %s253, 2
          %s255 = scalar_lea.vmem [#allocation5], %s254
          %256 = dma.done %s252, 32
        $region48: #{tpu_custom_call.1} parent=43 // pred_fallthru
          _
      $region44: #{tpu_custom_call.1} parent=5 // pred_fallthru
        _
    $region6: #{tpu_custom_call.1} parent=1 // loop_footer
      %s17 = sadd.s32 1, %s13
    $region7: #{tpu_custom_call.1} parent=1 // loop_footer_branch
      %12 = sbr.rel target = $region3
    $region8: #{tpu_custom_call.1} parent=1 // loop_exit
      _
    %257 = vsyncpa [#allocation3], 1
    %s258 = scalar_lea.sflag [#allocation3], 1
    %259 = vsyncpa %s258, 1
    %260 = vsyncpa [#allocation4], 1
    %s261 = scalar_lea.sflag [#allocation4], 1
    %262 = vsyncpa %s261, 1

</llo_original>
